<compile_context>
chip_gen: v7x
topology: tpu7x:2x2x1
jax: 0.10.0
libtpu: 0.0.40
codegen_flags: <defaults>
</compile_context>

<pallas_src>
import functools

import jax
import jax.numpy as jnp
from jax.experimental import pallas as pl
from jax.experimental.pallas import tpu as pltpu

_LANE = 128
_MAX_SINGLE_CHUNK_LANES = 64 * _LANE   # 8192: bound on the unrolled slab loop


def _round_up(a, b):
    return ((a + b - 1) // b) * b


def _vmem_budget():
    """(target input-block bytes, vmem_limit_bytes), tuned per chip generation."""
    try:
        cap = pltpu.get_tpu_info().vmem_capacity_bytes
    except Exception:
        cap = None
    if cap is not None and cap >= (100 << 20):   # v5e / v6e: 128 MiB VMEM
        return 8 << 20, 64 << 20
    return 6 << 20, 40 << 20                     # v7x (64 MiB VMEM) / unknown


def _fold_full_slabs(x_ref, n_sub, max_dtype):
    """Pairwise-fold `n_sub` full 128-lane slabs of x_ref.

    Returns (psum_f32, pmax) of shape (rows, 128), or (None, None) if
    n_sub == 0.  Pairwise combining halves the RMW traffic on the running
    partials (helps the single vector-store slot on v5e); sums are f32,
    maxes stay in `max_dtype` (input dtype for floating inputs -> packed
    bf16 VALU on v6e/v7x).
    """
    psum = None
    pmax = None
    s = 0
    while s < n_sub:
        a = x_ref[:, s * _LANE:(s + 1) * _LANE]
        if s + 1 < n_sub:
            b = x_ref[:, (s + 1) * _LANE:(s + 2) * _LANE]
            part_sum = a.astype(jnp.float32) + b.astype(jnp.float32)
            part_max = jnp.maximum(a, b).astype(max_dtype)
            s += 2
        else:
            part_sum = a.astype(jnp.float32)
            part_max = a.astype(max_dtype)
            s += 1
        psum = part_sum if psum is None else psum + part_sum
        pmax = part_max if pmax is None else jnp.maximum(pmax, part_max)
    return psum, pmax


def _single_chunk_kernel(x_ref, out_ref, *, n_sub, tail_rem, inv_hw, max_dtype):
    """One row tile; the whole spatial extent sits in one VMEM block.

    x_ref:   (tm, L) input block
    out_ref: (tm, 2) output block; lane 0 = avg, lane 1 = max
    """
    f32 = jnp.float32
    if n_sub > 0:
        psum, pmax = _fold_full_slabs(x_ref, n_sub, max_dtype)
        row_sum = jnp.sum(psum, axis=-1, keepdims=True)
        row_max = jnp.max(pmax, axis=-1, keepdims=True).astype(f32)
        if tail_rem:
            # Statically sized ragged tail (< 128 lanes) -- in-bounds, no mask.
            rag = x_ref[:, n_sub * _LANE:n_sub * _LANE + tail_rem]
            row_sum = row_sum + jnp.sum(rag.astype(f32), axis=-1, keepdims=True)
            row_max = jnp.maximum(
                row_max,
                jnp.max(rag.astype(max_dtype), axis=-1, keepdims=True).astype(f32))
    else:
        rag = x_ref[:, :tail_rem]   # L < 128: the block itself is the ragged slab
        row_sum = jnp.sum(rag.astype(f32), axis=-1, keepdims=True)
        row_max = jnp.max(rag.astype(max_dtype), axis=-1, keepdims=True).astype(f32)

    out_ref[:, 0:1] = (row_sum * inv_hw).astype(out_ref.dtype)
    out_ref[:, 1:2] = row_max.astype(out_ref.dtype)


def _multi_chunk_kernel(x_ref, out_ref, sum_acc, max_acc, *,
                        num_k, n_sub_body, n_sub_tail, tail_rem, inv_hw):
    """grid = (row tiles [parallel], spatial chunks [arbitrary]).

    x_ref:   (tm, chunk) input block
    out_ref: (tm, 2) output block, resident across the chunk axis
    sum_acc: (tm, 128) f32 running-sum scratch
    max_acc: (tm, 128) running-max scratch (input dtype when floating)
    """
    k = pl.program_id(1)
    f32 = jnp.float32
    max_dtype = max_acc.dtype

    @pl.when(k == 0)
    def _init():
        sum_acc[...] = jnp.zeros_like(sum_acc)
        max_acc[...] = jnp.full_like(max_acc, -jnp.inf)

    def _accumulate(n_sub, rem):
        psum, pmax = _fold_full_slabs(x_ref, n_sub, max_dtype)
        if psum is not None:
            sum_acc[...] = sum_acc[...] + psum
            max_acc[...] = jnp.maximum(max_acc[...], pmax)
        if rem:
            # Statically sized in-bounds tail slab; never touches OOB lanes.
            rag = x_ref[:, n_sub * _LANE:n_sub * _LANE + rem]
            sum_acc[:, 0:1] = sum_acc[:, 0:1] + jnp.sum(
                rag.astype(f32), axis=-1, keepdims=True)
            max_acc[:, 0:1] = jnp.maximum(
                max_acc[:, 0:1],
                jnp.max(rag.astype(max_dtype), axis=-1, keepdims=True))

    if n_sub_body == n_sub_tail and tail_rem == 0:
        _accumulate(n_sub_body, 0)          # uniform chunks: single fast path
    else:
        @pl.when(k < num_k - 1)
        def _body():                        # unmasked fast path
            _accumulate(n_sub_body, 0)

        @pl.when(k == num_k - 1)
        def _tail():                        # tail chunk only
            _accumulate(n_sub_tail, tail_rem)

    @pl.when(k == num_k - 1)
    def _finalize():
        row_sum = jnp.sum(sum_acc[...], axis=-1, keepdims=True)
        row_max = jnp.max(max_acc[...], axis=-1, keepdims=True).astype(f32)
        out_ref[:, 0:1] = (row_sum * inv_hw).astype(out_ref.dtype)
        out_ref[:, 1:2] = row_max.astype(out_ref.dtype)


def adaptive_catavgmax_pool2d(x, output_size=1):
    """Pallas TPU equivalent of adaptive_catavgmax_pool2d (output_size=1)."""
    # TODO(synk): only output_size=1 (global pooling) is implemented; general
    # adaptive output sizes would need per-bin window index math.
    assert output_size in (1, (1, 1)), "only output_size=1 supported"
    N, C, H, W = x.shape
    M, L = N * C, H * W
    x_flat = x.reshape(M, L)

    itemsize = jnp.dtype(x.dtype).itemsize
    target_block, vmem_limit = _vmem_budget()
    padded_L = _round_up(L, _LANE)               # count VMEM lane padding
    row_bytes = padded_L * itemsize
    inv_hw = 1.0 / float(L)
    max_dtype = x.dtype if jnp.issubdtype(x.dtype, jnp.floating) else jnp.float32

    # Row-tile granularity: native sublane tile for this dtype.
    sub = max(8, 32 // max(itemsize, 1))
    if M <= sub:
        tm_cap = M                               # block dim == full array dim
    else:
        # >= 2 row tiles so the 'parallel' axis shards across both v7x TCs.
        tm_cap = _round_up(pl.cdiv(M, 2), sub)

    if L <= _MAX_SINGLE_CHUNK_LANES:
        # --- Single-chunk path: one block spans the full spatial extent ---
        budget_rows = max(sub, (target_block // row_bytes) // sub * sub)
        tm = M if M <= sub else min(tm_cap, budget_rows)
        num_m = pl.cdiv(M, tm)
        n_sub, tail_rem = divmod(L, _LANE)

        kernel = functools.partial(
            _single_chunk_kernel, n_sub=n_sub, tail_rem=tail_rem,
            inv_hw=inv_hw, max_dtype=max_dtype)
        out = pl.pallas_call(
            kernel,
            grid=(num_m,),
            in_specs=[pl.BlockSpec((tm, L), lambda i: (i, 0))],
            out_specs=pl.BlockSpec((tm, 2), lambda i: (i, 0)),
            out_shape=jax.ShapeDtypeStruct((M, 2), x.dtype),
            compiler_params=pltpu.CompilerParams(
                dimension_semantics=("parallel",),
                vmem_limit_bytes=vmem_limit),
        )(x_flat)
    else:
        # --- Multi-chunk path (very large H*W): resident accumulators ---
        tm = M if M <= sub else min(tm_cap, 512)
        lanes_budget = (target_block // (tm * itemsize)) // _LANE * _LANE
        chunk = int(min(max(_LANE, lanes_budget), padded_L,
                        _MAX_SINGLE_CHUNK_LANES))
        num_k = pl.cdiv(L, chunk)
        num_m = pl.cdiv(M, tm)
        rem_total = L - (num_k - 1) * chunk
        n_sub_body = chunk // _LANE
        n_sub_tail, tail_rem = divmod(rem_total, _LANE)

        kernel = functools.partial(
            _multi_chunk_kernel, num_k=num_k, n_sub_body=n_sub_body,
            n_sub_tail=n_sub_tail, tail_rem=tail_rem, inv_hw=inv_hw)
        out = pl.pallas_call(
            kernel,
            grid=(num_m, num_k),
            in_specs=[pl.BlockSpec((tm, chunk), lambda i, k: (i, k))],
            out_specs=pl.BlockSpec((tm, 2), lambda i, k: (i, 0)),
            out_shape=jax.ShapeDtypeStruct((M, 2), x.dtype),
            scratch_shapes=[pltpu.VMEM((tm, _LANE), jnp.float32),
                            pltpu.VMEM((tm, _LANE), max_dtype)],
            compiler_params=pltpu.CompilerParams(
                dimension_semantics=("parallel", "arbitrary"),
                vmem_limit_bytes=vmem_limit),
        )(x_flat)

    out = out.reshape(N, C, 2)
    avg = out[..., 0]
    mx = out[..., 1]
    # torch.cat((avg_pool, max_pool), dim=1)
    return jnp.concatenate((avg, mx), axis=1).reshape(N, 2 * C, 1, 1)


class AdaptiveCatAvgMaxPool2d:
    def __init__(self, output_size=1):
        self.output_size = output_size

    def __call__(self, x):
        return adaptive_catavgmax_pool2d(x, self.output_size)


def _reference(x):
    return jnp.concatenate(
        (jnp.mean(x, axis=(2, 3), keepdims=True),
         jnp.max(x, axis=(2, 3), keepdims=True)), axis=1)


if __name__ == "__main__":
    key = jax.random.PRNGKey(0)
    k0, k1, k2 = jax.random.split(key, 3)
    module = AdaptiveCatAvgMaxPool2d(output_size=1)

    # Primary shape implied by the module spec.
    x = jax.random.normal(k0, (2, 4, 16, 16), dtype=jnp.float32)
    out = jax.block_until_ready(module(x))
    ref = _reference(x)
    assert out.shape == (2, 8, 1, 1), out.shape
    assert jnp.allclose(out, ref, atol=1e-5, rtol=1e-5), float(
        jnp.max(jnp.abs(out - ref)))

    # Ragged single-chunk path (H*W = 49 < 128), the common pooling-head case.
    x2 = jax.random.normal(k1, (2, 3, 7, 7), dtype=jnp.float32)
    out2 = jax.block_until_ready(module(x2))
    assert jnp.allclose(out2, _reference(x2), atol=1e-5, rtol=1e-5)

    # Multi-chunk accumulator path (H*W = 9409 > 8192) with a ragged tail.
    x3 = jax.random.normal(k2, (1, 2, 97, 97), dtype=jnp.float32)
    out3 = jax.block_until_ready(module(x3))
    assert jnp.allclose(out3, _reference(x3), atol=1e-5, rtol=1e-5)

    print("KERNEL_OK")
</pallas_src>

<mosaic_0001>
module attributes {stable_mosaic.version = 11 : i64} {
  func.func @_single_chunk_kernel(%arg0: i32, %arg1: memref<8x256xf32, #tpu.memory_space<vmem>>, %arg2: memref<8x2xf32, #tpu.memory_space<vmem>>) attributes {dimension_semantics = [#tpu.dimension_semantics<parallel>], iteration_bounds = array<i64: 1>, scalar_prefetch = 0 : i64, scratch_operands = 0 : i64, tpu.core_type = #tpu.core_type<tc>, window_params = [{transform_indices = @transform_0, window_bounds = array<i64: 8, 256>}, {transform_indices = @transform_1, window_bounds = array<i64: 8, 2>}]} {
    %c0 = arith.constant 0 : index
    %c0_0 = arith.constant 0 : index
    %0 = vector.load %arg1[%c0, %c0_0] : memref<8x256xf32, #tpu.memory_space<vmem>>, vector<8x128xf32>
    %c0_1 = arith.constant 0 : index
    %c128 = arith.constant 128 : index
    %1 = vector.load %arg1[%c0_1, %c128] : memref<8x256xf32, #tpu.memory_space<vmem>>, vector<8x128xf32>
    %2 = arith.addf %0, %1 : vector<8x128xf32>
    %3 = arith.maximumf %0, %1 : vector<8x128xf32>
    %cst = arith.constant dense<0.000000e+00> : vector<8xf32>
    %4 = vector.multi_reduction <add>, %2, %cst [1] : vector<8x128xf32> to vector<8xf32>
    %5 = vector.shape_cast %4 : vector<8xf32> to vector<8x1xf32>
    %cst_2 = arith.constant dense<0xFF800000> : vector<8xf32>
    %6 = vector.multi_reduction <maximumf>, %3, %cst_2 [1] : vector<8x128xf32> to vector<8xf32>
    %7 = vector.shape_cast %6 : vector<8xf32> to vector<8x1xf32>
    %cst_3 = arith.constant 3.906250e-03 : f32
    %8 = vector.broadcast %cst_3 : f32 to vector<8x1xf32>
    %9 = arith.mulf %5, %8 : vector<8x1xf32>
    %c0_4 = arith.constant 0 : index
    %c0_5 = arith.constant 0 : index
    %10 = vector.load %arg2[%c0_4, %c0_5] : memref<8x2xf32, #tpu.memory_space<vmem>>, vector<8x1xf32>
    tpu.vector_store %arg2[%c0_4, %c0_5], %9 {strides = array<i32>} : memref<8x2xf32, #tpu.memory_space<vmem>>, vector<8x1xf32>,
    %c0_6 = arith.constant 0 : index
    %c1 = arith.constant 1 : index
    %11 = vector.load %arg2[%c0_6, %c1] : memref<8x2xf32, #tpu.memory_space<vmem>>, vector<8x1xf32>
    tpu.vector_store %arg2[%c0_6, %c1], %7 {strides = array<i32>} : memref<8x2xf32, #tpu.memory_space<vmem>>, vector<8x1xf32>,
    return
  }
  func.func @transform_0(%arg0: i32) -> (i32, i32) {
    %c0_i32 = arith.constant 0 : i32
    %c0_i32_0 = arith.constant 0 : i32
    return %arg0, %c0_i32 : i32, i32
  }
  func.func @transform_1(%arg0: i32) -> (i32, i32) {
    %c0_i32 = arith.constant 0 : i32
    %c0_i32_0 = arith.constant 0 : i32
    return %arg0, %c0_i32 : i32, i32
  }
}

</mosaic_0001>

<llo_original>
// kernel: tpu_custom_call.1
$region0: #{tpu_custom_call.1}
  #allocation0 [shape = 'u32[]', space=smem, size = 0x4, offset = 0x4, fixed_abs, tag = 'smem constant byte address 0x4 - core index']
  #allocation1 [shape = 'u32[144,128]{1,0:T(1,128)}', space=vmem, size = 0x12000, scoped, tag = 'internal scratch']
  %s0 = inlined_call_operand.hbm [shape: f32[8,256], index: 0, kind: input, shape index: {}]
  %s1 = inlined_call_operand.vmem [shape: f32[8,2], index: 1, kind: output, shape index: {}]
  %s2 = sld [smem:[#allocation0]]
  $region18: #{tpu_custom_call.1} parent=0
    _
  %s4 = ssub.s32 1, %s2
  %s5 = scalar_select 0, %s4, %s2
  $region1: #{tpu_custom_call.1} parent=0
    #allocation2 [shape = 'u8[8192]{0}', space=vmem, size = 0x2000, scoped, tag = 'input window, operand 0, single buffered']
    #allocation3 [shape = 's32[1]{0}', space=sflag, size = 0x4, scoped, tag = 'scoped memory for tpu_custom_call.1']
    %6 = vsyncpa [#allocation3], 0
    // Predicated region
    $region2: #{tpu_custom_call.1} parent=1 // pred_check
      _
    $region3: #{tpu_custom_call.1} parent=1 // pred_check_branch
      %8 = sbr.rel (0) target = $region5
    $region4: #{tpu_custom_call.1} parent=1 // pred_region
      %s10 = ssub.s32 256, 256
      %11 = vsyncadd [#allocation3], %s10
      %s13 = sshll.u32 [#allocation2], 4
      %s14 = int_to_ptr.vmem [resolvable:$true] %s13
      %16 = dma.hbm_to_vmem [thread:$0]  %s0, 256, %s14, [#allocation3]
    $region5: #{tpu_custom_call.1} parent=1 // pred_fallthru
      _
    // Predicated region
    $region6: #{tpu_custom_call.1} parent=1 // pred_check
      _
    $region7: #{tpu_custom_call.1} parent=1 // pred_check_branch
      %18 = sbr.rel (0) target = $region9
    $region8: #{tpu_custom_call.1} parent=1 // pred_region
      %19 = dma.done [#allocation3], 256
    $region9: #{tpu_custom_call.1} parent=1 // pred_fallthru
      _
    %v20 = vld [vmem:[#allocation2] sm:$0xff]
    %v21 = vld [vmem:[#allocation2 + $0x8] sm:$0xff]
    %v22 = vadd.f32 %v20, %v21
    %v23 = vmax.f32 %v20, %v21
    %24 = vadd.xlane.f32.xlu0 %v22
    %v25 = vpop.xlane.xlu0 %24
    %26 = vmax.xlane.f32.xlu0 %v23
    %v27 = vpop.xlane.xlu0 %26
    %v28 = vmul.f32 %v25, 0.00390625
    %vm29 = vcmask 7168
    %30 = vst.msk [vmem:[%s1] sm:$0xff] %vm29, %v28
    %vm31 = vcmask 15368
    %32 = vst.msk [vmem:[%s1] sm:$0xff] %vm31, %v27
    // Predicated region
    $region10: #{tpu_custom_call.1} parent=1 // pred_check
      _
    $region11: #{tpu_custom_call.1} parent=1 // pred_check_branch
      %34 = sbr.rel (0) target = $region13
    $region12: #{tpu_custom_call.1} parent=1 // pred_region
      _
    $region13: #{tpu_custom_call.1} parent=1 // pred_fallthru
      _
    // Predicated region
    $region14: #{tpu_custom_call.1} parent=1 // pred_check
      _
    $region15: #{tpu_custom_call.1} parent=1 // pred_check_branch
      %36 = sbr.rel (0) target = $region17
    $region16: #{tpu_custom_call.1} parent=1 // pred_region
      _
    $region17: #{tpu_custom_call.1} parent=1 // pred_fallthru
      _
    %37 = vsyncpa [#allocation3], 1

</llo_original>
